<compile_context>
chip_gen: v6e
topology: v6e:2x2x1
jax: 0.10.0
libtpu: 0.0.40
codegen_flags: <defaults>
</compile_context>

<pallas_src>
import math
import numpy as np
import jax
import jax.numpy as jnp
from jax.experimental import pallas as pl
from jax.experimental.pallas import tpu as pltpu

# ----------------------- small, module-consistent config ---------------------
LAYERS = 3
FEATURE_DIM = 32
CONV_FILTER_SIZES = [3, 7]          # -> num_conv_choice = 4 (normal/dilated each)
IN_CHANNELS = 4
SEQ_LEN = 16
BATCH = 2
# arch = [block_0, conn_0, block_1, conn_1, block_2, conn_2]
ARCH = [0, 0, 3, 1, 1, 2]
BN_EPS = 1e-5

LANE_TARGET = 1024                  # target lanes (samples * L) per grid step
SUBLANE_PACK = 16                   # bf16 sublane packing for channel padding


def _round_up(v, m):
    return ((v + m - 1) // m) * m


def _layer_cfg(arch, filter_list):
    n = len(arch) // 2
    blocks = [arch[2 * i] for i in range(n)]
    conns = [arch[2 * i + 1] for i in range(n)]
    cfg = []
    for bid in blocks:
        fs = filter_list[bid // 2]
        dil = 1 if bid % 2 == 0 else 2
        pad = (fs - 1) // 2 if dil == 1 else fs - 1
        cfg.append((fs, dil, pad))
    return cfg, conns


def _bn_affine(gamma, beta, mean, var, eps):
    scale = float(gamma / np.sqrt(var + eps))
    shift = float(beta - mean * scale)
    return scale, shift


# ------------------------------ Pallas forward --------------------------------
def ezgeno_forward_pallas(x4d, conv_ws, conv_bs, fc_w, fc_b, arch,
                          bn_gamma=1.0, bn_beta=0.0, bn_mean=0.0, bn_var=1.0,
                          bn_eps=BN_EPS):
    """x4d: (N, 1, Cin, L) float32 (PyTorch BatchNorm2d(1)-style input)."""
    layer_cfg, conns = _layer_cfg(arch, CONV_FILTER_SIZES)
    layers = len(layer_cfg)

    N, _, cin, L = (int(s) for s in x4d.shape)
    feat = int(conv_ws[0].shape[0])
    bn_scale, bn_shift = _bn_affine(bn_gamma, bn_beta, bn_mean, bn_var, bn_eps)

    # ---- batch packing: nb samples -> nb*L lanes, rounded to 128 lanes ------
    # (for large N this yields multiple grid tiles, which the "parallel" axis
    #  shards across v7x's two TensorCores; small N is zero-padded up to a
    #  full 128-lane row so stores stay lane-dense).
    lane_quant = 128 // math.gcd(L, 128)          # min nb with nb*L % 128 == 0
    nb = min(N, max(1, LANE_TARGET // L))
    nb = _round_up(max(nb, 1), lane_quant)
    nbl = nb * L                                  # lanes per grid step (%128==0)
    num_tiles = max(1, -(-N // nb))
    n_pad = num_tiles * nb

    cin_p = _round_up(cin, SUBLANE_PACK)          # sublane-align layer-0 channels

    # ---- input: (N,1,Cin,L) -> (tiles, cin_p, nb*L), batch on the lane axis --
    x3 = x4d[:, 0].astype(jnp.float32)                                   # (N,Cin,L)
    x3 = jnp.pad(x3, ((0, n_pad - N), (0, cin_p - cin), (0, 0)))
    xp = (x3.reshape(num_tiles, nb, cin_p, L)
             .transpose(0, 2, 1, 3)
             .reshape(num_tiles, cin_p, nbl))

    # ---- weights: im2col layout (Cout, fs*Cin) in bf16, rows tap-major ------
    # NOTE: layer-0 channel rows cin..cin_p-1 are zero in xp; BN turns them into
    # bn_shift, but the matching weight columns below are zero-padded so they
    # contribute exactly nothing to the matmul.
    ws2, bs2 = [], []
    for li, (fs, dil, pad) in enumerate(layer_cfg):
        w = conv_ws[li]                                                  # (Cout,Cin,fs)
        cout, ci, _ = (int(s) for s in w.shape)
        ci_p = cin_p if li == 0 else ci
        if ci_p != ci:
            w = jnp.pad(w, ((0, 0), (0, ci_p - ci), (0, 0)))
        w2 = jnp.transpose(w, (0, 2, 1)).reshape(cout, fs * ci_p)
        ws2.append(w2.astype(jnp.bfloat16))          # bf16 MXU operands
        bs2.append(conv_bs[li].reshape(-1, 1).astype(jnp.float32))
    fc_w2 = fc_w.reshape(1, feat).astype(jnp.float32)
    fc_b2 = fc_b.reshape(1, 1).astype(jnp.float32)

    pow2_L = (L & (L - 1)) == 0

    def kernel(*refs):
        x_ref = refs[0]
        w_refs = refs[1:1 + layers]
        b_refs = refs[1 + layers:1 + 2 * layers]
        fcw_ref = refs[1 + 2 * layers]
        fcb_ref = refs[2 + 2 * layers]
        o_ref = refs[3 + 2 * layers]

        # per-lane within-sample position (lane % L), computed once from iota
        lane = jax.lax.broadcasted_iota(jnp.int32, (1, nbl), 1)
        pos = (lane & (L - 1)) if pow2_L else (lane % L)

        # BatchNorm2d(1), eval mode, folded to a scalar affine (applied once).
        x_bn = x_ref[0].astype(jnp.float32) * bn_scale + bn_shift    # (cin_p, nbl)

        def tap(src, d):
            # src[:, i] -> src[:, i + d] within each sample, zero outside it
            # (== Conv1d zero padding; also blocks cross-sample reads in the
            # lane-packed layout; wrap-around lanes are always masked).
            if d == 0:
                return src
            t = pltpu.roll(src, shift=(-d) % nbl, axis=1)
            valid = (pos < (L - d)) if d > 0 else (pos >= -d)
            return jnp.where(valid, t, 0.0)

        fmaps = []
        cur = x_bn
        for li, (fs, dil, pad) in enumerate(layer_cfg):
            pieces = [tap(cur, k * dil - pad) for k in range(fs)]
            rhs = pieces[0] if fs == 1 else jnp.concatenate(pieces, axis=0)
            pre = jnp.dot(w_refs[li][...], rhs.astype(jnp.bfloat16),
                          preferred_element_type=jnp.float32) + b_refs[li][...]
            out = jnp.maximum(pre, 0.0)              # Conv1d + bias + ReLU
            if conns[li] != 0:                       # skip connection (0 = none)
                out = out + fmaps[conns[li] - 1]
            fmaps.append(out)
            cur = out

        # Dropout(p=0.5): identity in eval mode.
        # AdaptiveMaxPool1d(1): roll-max suffix tree over each sample's L lanes;
        # the lane at pos==0 of every sample ends up with the full sample max.
        m = cur
        s = 1
        while s < L:
            rolled = pltpu.roll(m, shift=(nbl - s) % nbl, axis=1)
            m = jnp.where(pos < (L - s), jnp.maximum(m, rolled), m)
            s *= 2

        # Lane-dense classifier: (1, feat) x (feat, nb*L) matmul + sigmoid.
        # Only pos==0 lanes are consumed by the wrapper (strided slice); the
        # remaining lanes are free filler that keeps the store unmasked.
        logits = jnp.dot(fcw_ref[...], m,
                         preferred_element_type=jnp.float32) + fcb_ref[...]
        o_ref[0] = pl.reciprocal(1.0 + jnp.exp(-logits),
                                 approx=True).astype(o_ref.dtype)

    in_specs = [pl.BlockSpec((1, cin_p, nbl), lambda g: (g, 0, 0))]
    for wmat in ws2:
        in_specs.append(pl.BlockSpec(wmat.shape, lambda g: (0, 0)))
    for bvec in bs2:
        in_specs.append(pl.BlockSpec(bvec.shape, lambda g: (0, 0)))
    in_specs.append(pl.BlockSpec(fc_w2.shape, lambda g: (0, 0)))     # fc weight
    in_specs.append(pl.BlockSpec(fc_b2.shape, lambda g: (0, 0)))     # fc bias

    out = pl.pallas_call(
        kernel,
        out_shape=jax.ShapeDtypeStruct((num_tiles, 1, nbl), jnp.float32),
        grid=(num_tiles,),
        in_specs=in_specs,
        out_specs=pl.BlockSpec((1, 1, nbl), lambda g: (g, 0, 0)),
        compiler_params=pltpu.CompilerParams(dimension_semantics=("parallel",)),
    )(xp, *ws2, *bs2, fc_w2, fc_b2)

    # lane-dense (tiles, nb*L) sigmoid rows; sample s's value lives at lane s*L
    res = out[:, 0, :].reshape(num_tiles * nb, L)[:, 0]
    return res[:N].reshape(N, 1)                    # (N, 1), matches PyTorch


# ------------------------------ pure-JAX reference ----------------------------
def _conv1d_ref(x, w, b, dil, pad):
    # x: (N, Cin, L), w: (Cout, Cin, fs)
    out = jax.lax.conv_general_dilated(
        x, w, window_strides=(1,), padding=[(pad, pad)], rhs_dilation=(dil,),
        dimension_numbers=('NCH', 'OIH', 'NCH'))
    return out + b[None, :, None]


def ezgeno_forward_ref(x4d, conv_ws, conv_bs, fc_w, fc_b, arch,
                       bn_gamma=1.0, bn_beta=0.0, bn_mean=0.0, bn_var=1.0,
                       bn_eps=BN_EPS):
    layer_cfg, conns = _layer_cfg(arch, CONV_FILTER_SIZES)
    bn_scale, bn_shift = _bn_affine(bn_gamma, bn_beta, bn_mean, bn_var, bn_eps)
    x = x4d * bn_scale + bn_shift
    x = x[:, 0]                                                     # (N, Cin, L)
    fmaps = []
    for li, (fs, dil, pad) in enumerate(layer_cfg):
        x = jnp.maximum(_conv1d_ref(x, conv_ws[li], conv_bs[li], dil, pad), 0.0)
        if conns[li] != 0:
            x = x + fmaps[conns[li] - 1]
        fmaps.append(x)
    pooled = jnp.max(x, axis=-1)                                    # (N, feat)
    logit = pooled @ fc_w.T + fc_b[None, :]
    return jax.nn.sigmoid(logit)


# ------------------------------------ main ------------------------------------
if __name__ == "__main__":
    key = jax.random.PRNGKey(0)
    k_x, k_fc_w, k_fc_b, *k_layers = jax.random.split(key, 3 + 2 * LAYERS)

    layer_cfg, _ = _layer_cfg(ARCH, CONV_FILTER_SIZES)
    channels = [IN_CHANNELS] + [FEATURE_DIM] * LAYERS

    conv_ws, conv_bs = [], []
    for li, (fs, dil, pad) in enumerate(layer_cfg):
        cin, cout = channels[li], channels[li + 1]
        kw, kb = k_layers[2 * li], k_layers[2 * li + 1]
        conv_ws.append(0.1 * jax.random.normal(kw, (cout, cin, fs), jnp.float32))
        conv_bs.append(0.05 * jax.random.normal(kb, (cout,), jnp.float32))

    fc_w = 0.1 * jax.random.normal(k_fc_w, (1, FEATURE_DIM), jnp.float32)
    fc_b = 0.05 * jax.random.normal(k_fc_b, (1,), jnp.float32)

    x = jax.random.normal(k_x, (BATCH, 1, IN_CHANNELS, SEQ_LEN), jnp.float32)

    out = jax.block_until_ready(
        ezgeno_forward_pallas(x, conv_ws, conv_bs, fc_w, fc_b, ARCH))
    ref = jax.block_until_ready(
        ezgeno_forward_ref(x, conv_ws, conv_bs, fc_w, fc_b, ARCH))

    # bf16 MXU operands (f32 accumulation) + EUP approx reciprocal in the
    # sigmoid: compare at 1e-2 against the all-f32 reference.
    np.testing.assert_allclose(np.asarray(out), np.asarray(ref),
                               rtol=1e-2, atol=1e-2)
    assert out.shape == (BATCH, 1)
    print("KERNEL_OK")
</pallas_src>

<mosaic_0001>
module attributes {stable_mosaic.version = 11 : i64} {
  func.func @kernel(%arg0: i32, %arg1: memref<1x16x128xf32, #tpu.memory_space<vmem>>, %arg2: memref<32x48xbf16, #tpu.memory_space<vmem>>, %arg3: memref<32x224xbf16, #tpu.memory_space<vmem>>, %arg4: memref<32x96xbf16, #tpu.memory_space<vmem>>, %arg5: memref<32x1xf32, #tpu.memory_space<vmem>>, %arg6: memref<32x1xf32, #tpu.memory_space<vmem>>, %arg7: memref<32x1xf32, #tpu.memory_space<vmem>>, %arg8: memref<1x32xf32, #tpu.memory_space<vmem>>, %arg9: memref<1x1xf32, #tpu.memory_space<vmem>>, %arg10: memref<1x1x128xf32, #tpu.memory_space<vmem>>) attributes {dimension_semantics = [#tpu.dimension_semantics<parallel>], iteration_bounds = array<i64: 1>, scalar_prefetch = 0 : i64, scratch_operands = 0 : i64, tpu.core_type = #tpu.core_type<tc>, window_params = [{transform_indices = @transform_0, window_bounds = array<i64: 1, 16, 128>}, {pipeline_mode = #tpu.pipeline_mode<synchronous>, transform_indices = @transform_1, window_bounds = array<i64: 32, 48>}, {pipeline_mode = #tpu.pipeline_mode<synchronous>, transform_indices = @transform_2, window_bounds = array<i64: 32, 224>}, {pipeline_mode = #tpu.pipeline_mode<synchronous>, transform_indices = @transform_3, window_bounds = array<i64: 32, 96>}, {pipeline_mode = #tpu.pipeline_mode<synchronous>, transform_indices = @transform_4, window_bounds = array<i64: 32, 1>}, {pipeline_mode = #tpu.pipeline_mode<synchronous>, transform_indices = @transform_5, window_bounds = array<i64: 32, 1>}, {pipeline_mode = #tpu.pipeline_mode<synchronous>, transform_indices = @transform_6, window_bounds = array<i64: 32, 1>}, {pipeline_mode = #tpu.pipeline_mode<synchronous>, transform_indices = @transform_7, window_bounds = array<i64: 1, 32>}, {pipeline_mode = #tpu.pipeline_mode<synchronous>, transform_indices = @transform_8, window_bounds = array<i64: 1, 1>}, {transform_indices = @transform_9, window_bounds = array<i64: 1, 1, 128>}]} {
    %0 = tpu.iota {dimensions = array<i32: 1>} : vector<1x128xi32>
    %c15_i32 = arith.constant 15 : i32
    %1 = vector.broadcast %c15_i32 : i32 to vector<1x128xi32>
    %2 = arith.andi %0, %1 : vector<1x128xi32>
    %c0 = arith.constant 0 : index
    %c0_0 = arith.constant 0 : index
    %c0_1 = arith.constant 0 : index
    %3 = vector.load %arg1[%c0, %c0_0, %c0_1] : memref<1x16x128xf32, #tpu.memory_space<vmem>>, vector<1x16x128xf32>
    %4 = vector.shape_cast %3 : vector<1x16x128xf32> to vector<16x128xf32>
    %cst = arith.constant 0.999994993 : f32
    %5 = vector.broadcast %cst : f32 to vector<16x128xf32>
    %6 = arith.mulf %4, %5 : vector<16x128xf32>
    %cst_2 = arith.constant 0.000000e+00 : f32
    %7 = vector.broadcast %cst_2 : f32 to vector<16x128xf32>
    %8 = arith.addf %6, %7 : vector<16x128xf32>
    %c1_i32 = arith.constant 1 : i32
    %9 = tpu.dynamic_rotate %8 by %c1_i32 dim 1 : vector<16x128xf32>, i32 -> vector<16x128xf32>
    %c1_i32_3 = arith.constant 1 : i32
    %10 = vector.broadcast %c1_i32_3 : i32 to vector<1x128xi32>
    %11 = arith.cmpi sge, %2, %10 : vector<1x128xi32>
    %cst_4 = arith.constant 0.000000e+00 : f32
    %12 = vector.shape_cast %11 : vector<1x128xi1> to vector<1x128xi1>
    %13 = vector.broadcast %12 : vector<1x128xi1> to vector<16x128xi1>
    %14 = vector.broadcast %cst_4 : f32 to vector<16x128xf32>
    %15 = arith.select %13, %9, %14 : vector<16x128xi1>, vector<16x128xf32>
    %c127_i32 = arith.constant 127 : i32
    %16 = tpu.dynamic_rotate %8 by %c127_i32 dim 1 : vector<16x128xf32>, i32 -> vector<16x128xf32>
    %c15_i32_5 = arith.constant 15 : i32
    %17 = vector.broadcast %c15_i32_5 : i32 to vector<1x128xi32>
    %18 = arith.cmpi slt, %2, %17 : vector<1x128xi32>
    %cst_6 = arith.constant 0.000000e+00 : f32
    %19 = vector.shape_cast %18 : vector<1x128xi1> to vector<1x128xi1>
    %20 = vector.broadcast %19 : vector<1x128xi1> to vector<16x128xi1>
    %21 = vector.broadcast %cst_6 : f32 to vector<16x128xf32>
    %22 = arith.select %20, %16, %21 : vector<16x128xi1>, vector<16x128xf32>
    %23 = tpu.concatenate %15, %8, %22 in 0 : vector<16x128xf32>, vector<16x128xf32>, vector<16x128xf32> -> vector<48x128xf32>
    %c0_7 = arith.constant 0 : index
    %c0_8 = arith.constant 0 : index
    %24 = vector.load %arg2[%c0_7, %c0_8] : memref<32x48xbf16, #tpu.memory_space<vmem>>, vector<32x48xbf16>
    %25 = arith.truncf %23 : vector<48x128xf32> to vector<48x128xbf16>
    %cst_9 = arith.constant dense<0.000000e+00> : vector<32x128xf32>
    %26 = tpu.matmul %24, %25, %cst_9 {dimension_numbers = #tpu.dot_dimension_numbers<[1], [0], [0], [1], [0, 0, 1, 1], [], []>} : vector<32x48xbf16>, vector<48x128xbf16>, vector<32x128xf32> -> vector<32x128xf32>
    %c0_10 = arith.constant 0 : index
    %c0_11 = arith.constant 0 : index
    %27 = vector.load %arg5[%c0_10, %c0_11] : memref<32x1xf32, #tpu.memory_space<vmem>>, vector<32x1xf32>
    %28 = vector.broadcast %27 : vector<32x1xf32> to vector<32x128xf32>
    %29 = arith.addf %26, %28 : vector<32x128xf32>
    %cst_12 = arith.constant 0.000000e+00 : f32
    %30 = vector.broadcast %cst_12 : f32 to vector<32x128xf32>
    %31 = arith.maximumf %29, %30 : vector<32x128xf32>
    %c6_i32 = arith.constant 6 : i32
    %32 = tpu.dynamic_rotate %31 by %c6_i32 dim 1 : vector<32x128xf32>, i32 -> vector<32x128xf32>
    %c6_i32_13 = arith.constant 6 : i32
    %33 = vector.broadcast %c6_i32_13 : i32 to vector<1x128xi32>
    %34 = arith.cmpi sge, %2, %33 : vector<1x128xi32>
    %cst_14 = arith.constant 0.000000e+00 : f32
    %35 = vector.shape_cast %34 : vector<1x128xi1> to vector<1x128xi1>
    %36 = vector.broadcast %35 : vector<1x128xi1> to vector<32x128xi1>
    %37 = vector.broadcast %cst_14 : f32 to vector<32x128xf32>
    %38 = arith.select %36, %32, %37 : vector<32x128xi1>, vector<32x128xf32>
    %c4_i32 = arith.constant 4 : i32
    %39 = tpu.dynamic_rotate %31 by %c4_i32 dim 1 : vector<32x128xf32>, i32 -> vector<32x128xf32>
    %c4_i32_15 = arith.constant 4 : i32
    %40 = vector.broadcast %c4_i32_15 : i32 to vector<1x128xi32>
    %41 = arith.cmpi sge, %2, %40 : vector<1x128xi32>
    %cst_16 = arith.constant 0.000000e+00 : f32
    %42 = vector.shape_cast %41 : vector<1x128xi1> to vector<1x128xi1>
    %43 = vector.broadcast %42 : vector<1x128xi1> to vector<32x128xi1>
    %44 = vector.broadcast %cst_16 : f32 to vector<32x128xf32>
    %45 = arith.select %43, %39, %44 : vector<32x128xi1>, vector<32x128xf32>
    %c2_i32 = arith.constant 2 : i32
    %46 = tpu.dynamic_rotate %31 by %c2_i32 dim 1 : vector<32x128xf32>, i32 -> vector<32x128xf32>
    %c2_i32_17 = arith.constant 2 : i32
    %47 = vector.broadcast %c2_i32_17 : i32 to vector<1x128xi32>
    %48 = arith.cmpi sge, %2, %47 : vector<1x128xi32>
    %cst_18 = arith.constant 0.000000e+00 : f32
    %49 = vector.shape_cast %48 : vector<1x128xi1> to vector<1x128xi1>
    %50 = vector.broadcast %49 : vector<1x128xi1> to vector<32x128xi1>
    %51 = vector.broadcast %cst_18 : f32 to vector<32x128xf32>
    %52 = arith.select %50, %46, %51 : vector<32x128xi1>, vector<32x128xf32>
    %c126_i32 = arith.constant 126 : i32
    %53 = tpu.dynamic_rotate %31 by %c126_i32 dim 1 : vector<32x128xf32>, i32 -> vector<32x128xf32>
    %c14_i32 = arith.constant 14 : i32
    %54 = vector.broadcast %c14_i32 : i32 to vector<1x128xi32>
    %55 = arith.cmpi slt, %2, %54 : vector<1x128xi32>
    %cst_19 = arith.constant 0.000000e+00 : f32
    %56 = vector.shape_cast %55 : vector<1x128xi1> to vector<1x128xi1>
    %57 = vector.broadcast %56 : vector<1x128xi1> to vector<32x128xi1>
    %58 = vector.broadcast %cst_19 : f32 to vector<32x128xf32>
    %59 = arith.select %57, %53, %58 : vector<32x128xi1>, vector<32x128xf32>
    %c124_i32 = arith.constant 124 : i32
    %60 = tpu.dynamic_rotate %31 by %c124_i32 dim 1 : vector<32x128xf32>, i32 -> vector<32x128xf32>
    %c12_i32 = arith.constant 12 : i32
    %61 = vector.broadcast %c12_i32 : i32 to vector<1x128xi32>
    %62 = arith.cmpi slt, %2, %61 : vector<1x128xi32>
    %cst_20 = arith.constant 0.000000e+00 : f32
    %63 = vector.shape_cast %62 : vector<1x128xi1> to vector<1x128xi1>
    %64 = vector.broadcast %63 : vector<1x128xi1> to vector<32x128xi1>
    %65 = vector.broadcast %cst_20 : f32 to vector<32x128xf32>
    %66 = arith.select %64, %60, %65 : vector<32x128xi1>, vector<32x128xf32>
    %c122_i32 = arith.constant 122 : i32
    %67 = tpu.dynamic_rotate %31 by %c122_i32 dim 1 : vector<32x128xf32>, i32 -> vector<32x128xf32>
    %c10_i32 = arith.constant 10 : i32
    %68 = vector.broadcast %c10_i32 : i32 to vector<1x128xi32>
    %69 = arith.cmpi slt, %2, %68 : vector<1x128xi32>
    %cst_21 = arith.constant 0.000000e+00 : f32
    %70 = vector.shape_cast %69 : vector<1x128xi1> to vector<1x128xi1>
    %71 = vector.broadcast %70 : vector<1x128xi1> to vector<32x128xi1>
    %72 = vector.broadcast %cst_21 : f32 to vector<32x128xf32>
    %73 = arith.select %71, %67, %72 : vector<32x128xi1>, vector<32x128xf32>
    %74 = tpu.concatenate %38, %45, %52, %31, %59, %66, %73 in 0 : vector<32x128xf32>, vector<32x128xf32>, vector<32x128xf32>, vector<32x128xf32>, vector<32x128xf32>, vector<32x128xf32>, vector<32x128xf32> -> vector<224x128xf32>
    %c0_22 = arith.constant 0 : index
    %c0_23 = arith.constant 0 : index
    %75 = vector.load %arg3[%c0_22, %c0_23] : memref<32x224xbf16, #tpu.memory_space<vmem>>, vector<32x224xbf16>
    %76 = arith.truncf %74 : vector<224x128xf32> to vector<224x128xbf16>
    %cst_24 = arith.constant dense<0.000000e+00> : vector<32x128xf32>
    %77 = tpu.matmul %75, %76, %cst_24 {dimension_numbers = #tpu.dot_dimension_numbers<[1], [0], [0], [1], [0, 0, 1, 1], [], []>} : vector<32x224xbf16>, vector<224x128xbf16>, vector<32x128xf32> -> vector<32x128xf32>
    %c0_25 = arith.constant 0 : index
    %c0_26 = arith.constant 0 : index
    %78 = vector.load %arg6[%c0_25, %c0_26] : memref<32x1xf32, #tpu.memory_space<vmem>>, vector<32x1xf32>
    %79 = vector.broadcast %78 : vector<32x1xf32> to vector<32x128xf32>
    %80 = arith.addf %77, %79 : vector<32x128xf32>
    %cst_27 = arith.constant 0.000000e+00 : f32
    %81 = vector.broadcast %cst_27 : f32 to vector<32x128xf32>
    %82 = arith.maximumf %80, %81 : vector<32x128xf32>
    %83 = arith.addf %82, %31 : vector<32x128xf32>
    %c2_i32_28 = arith.constant 2 : i32
    %84 = tpu.dynamic_rotate %83 by %c2_i32_28 dim 1 : vector<32x128xf32>, i32 -> vector<32x128xf32>
    %c2_i32_29 = arith.constant 2 : i32
    %85 = vector.broadcast %c2_i32_29 : i32 to vector<1x128xi32>
    %86 = arith.cmpi sge, %2, %85 : vector<1x128xi32>
    %cst_30 = arith.constant 0.000000e+00 : f32
    %87 = vector.shape_cast %86 : vector<1x128xi1> to vector<1x128xi1>
    %88 = vector.broadcast %87 : vector<1x128xi1> to vector<32x128xi1>
    %89 = vector.broadcast %cst_30 : f32 to vector<32x128xf32>
    %90 = arith.select %88, %84, %89 : vector<32x128xi1>, vector<32x128xf32>
    %c126_i32_31 = arith.constant 126 : i32
    %91 = tpu.dynamic_rotate %83 by %c126_i32_31 dim 1 : vector<32x128xf32>, i32 -> vector<32x128xf32>
    %c14_i32_32 = arith.constant 14 : i32
    %92 = vector.broadcast %c14_i32_32 : i32 to vector<1x128xi32>
    %93 = arith.cmpi slt, %2, %92 : vector<1x128xi32>
    %cst_33 = arith.constant 0.000000e+00 : f32
    %94 = vector.shape_cast %93 : vector<1x128xi1> to vector<1x128xi1>
    %95 = vector.broadcast %94 : vector<1x128xi1> to vector<32x128xi1>
    %96 = vector.broadcast %cst_33 : f32 to vector<32x128xf32>
    %97 = arith.select %95, %91, %96 : vector<32x128xi1>, vector<32x128xf32>
    %98 = tpu.concatenate %90, %83, %97 in 0 : vector<32x128xf32>, vector<32x128xf32>, vector<32x128xf32> -> vector<96x128xf32>
    %c0_34 = arith.constant 0 : index
    %c0_35 = arith.constant 0 : index
    %99 = vector.load %arg4[%c0_34, %c0_35] : memref<32x96xbf16, #tpu.memory_space<vmem>>, vector<32x96xbf16>
    %100 = arith.truncf %98 : vector<96x128xf32> to vector<96x128xbf16>
    %cst_36 = arith.constant dense<0.000000e+00> : vector<32x128xf32>
    %101 = tpu.matmul %99, %100, %cst_36 {dimension_numbers = #tpu.dot_dimension_numbers<[1], [0], [0], [1], [0, 0, 1, 1], [], []>} : vector<32x96xbf16>, vector<96x128xbf16>, vector<32x128xf32> -> vector<32x128xf32>
    %c0_37 = arith.constant 0 : index
    %c0_38 = arith.constant 0 : index
    %102 = vector.load %arg7[%c0_37, %c0_38] : memref<32x1xf32, #tpu.memory_space<vmem>>, vector<32x1xf32>
    %103 = vector.broadcast %102 : vector<32x1xf32> to vector<32x128xf32>
    %104 = arith.addf %101, %103 : vector<32x128xf32>
    %cst_39 = arith.constant 0.000000e+00 : f32
    %105 = vector.broadcast %cst_39 : f32 to vector<32x128xf32>
    %106 = arith.maximumf %104, %105 : vector<32x128xf32>
    %107 = arith.addf %106, %83 : vector<32x128xf32>
    %c127_i32_40 = arith.constant 127 : i32
    %108 = tpu.dynamic_rotate %107 by %c127_i32_40 dim 1 : vector<32x128xf32>, i32 -> vector<32x128xf32>
    %c15_i32_41 = arith.constant 15 : i32
    %109 = vector.broadcast %c15_i32_41 : i32 to vector<1x128xi32>
    %110 = arith.cmpi slt, %2, %109 : vector<1x128xi32>
    %111 = arith.maximumf %107, %108 : vector<32x128xf32>
    %112 = vector.shape_cast %110 : vector<1x128xi1> to vector<1x128xi1>
    %113 = vector.broadcast %112 : vector<1x128xi1> to vector<32x128xi1>
    %114 = arith.select %113, %111, %107 : vector<32x128xi1>, vector<32x128xf32>
    %c126_i32_42 = arith.constant 126 : i32
    %115 = tpu.dynamic_rotate %114 by %c126_i32_42 dim 1 : vector<32x128xf32>, i32 -> vector<32x128xf32>
    %c14_i32_43 = arith.constant 14 : i32
    %116 = vector.broadcast %c14_i32_43 : i32 to vector<1x128xi32>
    %117 = arith.cmpi slt, %2, %116 : vector<1x128xi32>
    %118 = arith.maximumf %114, %115 : vector<32x128xf32>
    %119 = vector.shape_cast %117 : vector<1x128xi1> to vector<1x128xi1>
    %120 = vector.broadcast %119 : vector<1x128xi1> to vector<32x128xi1>
    %121 = arith.select %120, %118, %114 : vector<32x128xi1>, vector<32x128xf32>
    %c124_i32_44 = arith.constant 124 : i32
    %122 = tpu.dynamic_rotate %121 by %c124_i32_44 dim 1 : vector<32x128xf32>, i32 -> vector<32x128xf32>
    %c12_i32_45 = arith.constant 12 : i32
    %123 = vector.broadcast %c12_i32_45 : i32 to vector<1x128xi32>
    %124 = arith.cmpi slt, %2, %123 : vector<1x128xi32>
    %125 = arith.maximumf %121, %122 : vector<32x128xf32>
    %126 = vector.shape_cast %124 : vector<1x128xi1> to vector<1x128xi1>
    %127 = vector.broadcast %126 : vector<1x128xi1> to vector<32x128xi1>
    %128 = arith.select %127, %125, %121 : vector<32x128xi1>, vector<32x128xf32>
    %c120_i32 = arith.constant 120 : i32
    %129 = tpu.dynamic_rotate %128 by %c120_i32 dim 1 : vector<32x128xf32>, i32 -> vector<32x128xf32>
    %c8_i32 = arith.constant 8 : i32
    %130 = vector.broadcast %c8_i32 : i32 to vector<1x128xi32>
    %131 = arith.cmpi slt, %2, %130 : vector<1x128xi32>
    %132 = arith.maximumf %128, %129 : vector<32x128xf32>
    %133 = vector.shape_cast %131 : vector<1x128xi1> to vector<1x128xi1>
    %134 = vector.broadcast %133 : vector<1x128xi1> to vector<32x128xi1>
    %135 = arith.select %134, %132, %128 : vector<32x128xi1>, vector<32x128xf32>
    %c0_46 = arith.constant 0 : index
    %c0_47 = arith.constant 0 : index
    %136 = vector.load %arg8[%c0_46, %c0_47] : memref<1x32xf32, #tpu.memory_space<vmem>>, vector<1x32xf32>
    %cst_48 = arith.constant dense<0.000000e+00> : vector<1x128xf32>
    %137 = tpu.matmul %136, %135, %cst_48 {dimension_numbers = #tpu.dot_dimension_numbers<[1], [0], [0], [1], [0, 0, 1, 1], [], []>} : vector<1x32xf32>, vector<32x128xf32>, vector<1x128xf32> -> vector<1x128xf32>
    %c0_49 = arith.constant 0 : index
    %c0_50 = arith.constant 0 : index
    %138 = vector.load %arg9[%c0_49, %c0_50] : memref<1x1xf32, #tpu.memory_space<vmem>>, vector<1x1xf32>
    %139 = vector.broadcast %138 : vector<1x1xf32> to vector<1x128xf32>
    %140 = arith.addf %137, %139 : vector<1x128xf32>
    %cst_51 = arith.constant 0.000000e+00 : f32
    %141 = vector.broadcast %cst_51 : f32 to vector<1x128xf32>
    %142 = arith.subf %141, %140 : vector<1x128xf32>
    %143 = math.exp %142 : vector<1x128xf32>
    %cst_52 = arith.constant 1.000000e+00 : f32
    %144 = vector.broadcast %cst_52 : f32 to vector<1x128xf32>
    %145 = arith.addf %144, %143 : vector<1x128xf32>
    %146 = tpu.reciprocal %145 {approx = true} : vector<1x128xf32> -> vector<1x128xf32>
    %c0_53 = arith.constant 0 : index
    %c0_54 = arith.constant 0 : index
    %c0_55 = arith.constant 0 : index
    %147 = vector.load %arg10[%c0_53, %c0_54, %c0_55] : memref<1x1x128xf32, #tpu.memory_space<vmem>>, vector<1x1x128xf32>
    %148 = vector.shape_cast %147 : vector<1x1x128xf32> to vector<1x128xf32>
    %149 = vector.shape_cast %146 : vector<1x128xf32> to vector<1x1x128xf32>
    tpu.vector_store %arg10[%c0_53, %c0_54, %c0_55], %149 {strides = array<i32>} : memref<1x1x128xf32, #tpu.memory_space<vmem>>, vector<1x1x128xf32>,
    return
  }
  func.func @transform_0(%arg0: i32) -> (i32, i32, i32) {
    %c0_i32 = arith.constant 0 : i32
    %c0_i32_0 = arith.constant 0 : i32
    %c0_i32_1 = arith.constant 0 : i32
    return %arg0, %c0_i32, %c0_i32_0 : i32, i32, i32
  }
  func.func @transform_1(%arg0: i32) -> (i32, i32) {
    %c0_i32 = arith.constant 0 : i32
    %c0_i32_0 = arith.constant 0 : i32
    %c0_i32_1 = arith.constant 0 : i32
    return %c0_i32, %c0_i32_0 : i32, i32
  }
  func.func @transform_2(%arg0: i32) -> (i32, i32) {
    %c0_i32 = arith.constant 0 : i32
    %c0_i32_0 = arith.constant 0 : i32
    %c0_i32_1 = arith.constant 0 : i32
    return %c0_i32, %c0_i32_0 : i32, i32
  }
  func.func @transform_3(%arg0: i32) -> (i32, i32) {
    %c0_i32 = arith.constant 0 : i32
    %c0_i32_0 = arith.constant 0 : i32
    %c0_i32_1 = arith.constant 0 : i32
    return %c0_i32, %c0_i32_0 : i32, i32
  }
  func.func @transform_4(%arg0: i32) -> (i32, i32) {
    %c0_i32 = arith.constant 0 : i32
    %c0_i32_0 = arith.constant 0 : i32
    %c0_i32_1 = arith.constant 0 : i32
    return %c0_i32, %c0_i32_0 : i32, i32
  }
  func.func @transform_5(%arg0: i32) -> (i32, i32) {
    %c0_i32 = arith.constant 0 : i32
    %c0_i32_0 = arith.constant 0 : i32
    %c0_i32_1 = arith.constant 0 : i32
    return %c0_i32, %c0_i32_0 : i32, i32
  }
  func.func @transform_6(%arg0: i32) -> (i32, i32) {
    %c0_i32 = arith.constant 0 : i32
    %c0_i32_0 = arith.constant 0 : i32
    %c0_i32_1 = arith.constant 0 : i32
    return %c0_i32, %c0_i32_0 : i32, i32
  }
  func.func @transform_7(%arg0: i32) -> (i32, i32) {
    %c0_i32 = arith.constant 0 : i32
    %c0_i32_0 = arith.constant 0 : i32
    %c0_i32_1 = arith.constant 0 : i32
    return %c0_i32, %c0_i32_0 : i32, i32
  }
  func.func @transform_8(%arg0: i32) -> (i32, i32) {
    %c0_i32 = arith.constant 0 : i32
    %c0_i32_0 = arith.constant 0 : i32
    %c0_i32_1 = arith.constant 0 : i32
    return %c0_i32, %c0_i32_0 : i32, i32
  }
  func.func @transform_9(%arg0: i32) -> (i32, i32, i32) {
    %c0_i32 = arith.constant 0 : i32
    %c0_i32_0 = arith.constant 0 : i32
    %c0_i32_1 = arith.constant 0 : i32
    return %arg0, %c0_i32, %c0_i32_0 : i32, i32, i32
  }
}

</mosaic_0001>

<llo_original>
// kernel: tpu_custom_call.1
$region0: #{tpu_custom_call.1}
  #allocation0 [shape = 'u32[]', space=smem, size = 0x4, offset = 0x4, fixed_abs, tag = 'smem constant byte address 0x4 - core index']
  #allocation1 [shape = 'u32[144,128]{1,0:T(1,128)}', space=vmem, size = 0x12000, scoped, tag = 'internal scratch']
  #allocation2 [shape = 'f32[1,1]{1,0:T(1,128)S(1)}', space=vmem, size = 0x200, scoped, tag = 'scoped memory for tpu_custom_call.1']
  %s0 = inlined_call_operand.vmem [shape: f32[1,16,128], index: 0, kind: input, shape index: {}]
  %s1 = inlined_call_operand.vmem [shape: bf16[32,48], index: 1, kind: input, shape index: {}]
  %s2 = inlined_call_operand.vmem [shape: bf16[32,224], index: 2, kind: input, shape index: {}]
  %s3 = inlined_call_operand.vmem [shape: bf16[32,96], index: 3, kind: input, shape index: {}]
  %s4 = inlined_call_operand.vmem [shape: f32[32,1], index: 4, kind: input, shape index: {}]
  %s5 = inlined_call_operand.vmem [shape: f32[32,1], index: 5, kind: input, shape index: {}]
  %s6 = inlined_call_operand.vmem [shape: f32[32,1], index: 6, kind: input, shape index: {}]
  %s7 = inlined_call_operand.vmem [shape: f32[1,32], index: 7, kind: input, shape index: {}]
  %s8 = inlined_call_operand.<no memory space> [shape: f32[1,1], index: 8, kind: input, shape index: {}]
  %s9 = inlined_call_operand.hbm [shape: f32[1,1,128], index: 9, kind: output, shape index: {}]
  %s10 = sld [smem:[#allocation0]]
  $region46: #{tpu_custom_call.1} parent=0
    _
  %s12 = ssub.s32 1, %s10
  %s13 = scalar_select 0, %s12, %s10
  %v14 = vstv %s8
  %15 = vst [vmem:[#allocation2] sm:$0x1] %v14
  $region1: #{tpu_custom_call.1} parent=0
    #allocation3 [shape = 'u8[512]{0}', space=vmem, size = 0x400, scoped, tag = 'output window, operand 0, single buffered']
    #allocation4 [shape = 's32[1]{0}', space=sflag, size = 0x4, scoped, tag = 'scoped memory for tpu_custom_call.1']
    %16 = vsyncpa [#allocation4], 0
    // Predicated region
    $region2: #{tpu_custom_call.1} parent=1 // pred_check
      _
    $region3: #{tpu_custom_call.1} parent=1 // pred_check_branch
      %18 = sbr.rel (0) target = $region5
    $region4: #{tpu_custom_call.1} parent=1 // pred_region
      _
    $region5: #{tpu_custom_call.1} parent=1 // pred_fallthru
      _
    // Predicated region
    $region6: #{tpu_custom_call.1} parent=1 // pred_check
      _
    $region7: #{tpu_custom_call.1} parent=1 // pred_check_branch
      %20 = sbr.rel (0) target = $region9
    $region8: #{tpu_custom_call.1} parent=1 // pred_region
      _
    $region9: #{tpu_custom_call.1} parent=1 // pred_fallthru
      _
    // Predicated region
    $region10: #{tpu_custom_call.1} parent=1 // pred_check
      _
    $region11: #{tpu_custom_call.1} parent=1 // pred_check_branch
      %22 = sbr.rel (0) target = $region13
    $region12: #{tpu_custom_call.1} parent=1 // pred_region
      _
    $region13: #{tpu_custom_call.1} parent=1 // pred_fallthru
      _
    // Predicated region
    $region14: #{tpu_custom_call.1} parent=1 // pred_check
      _
    $region15: #{tpu_custom_call.1} parent=1 // pred_check_branch
      %24 = sbr.rel (0) target = $region17
    $region16: #{tpu_custom_call.1} parent=1 // pred_region
      _
    $region17: #{tpu_custom_call.1} parent=1 // pred_fallthru
      _
    // Predicated region
    $region18: #{tpu_custom_call.1} parent=1 // pred_check
      _
    $region19: #{tpu_custom_call.1} parent=1 // pred_check_branch
      %26 = sbr.rel (0) target = $region21
    $region20: #{tpu_custom_call.1} parent=1 // pred_region
      _
    $region21: #{tpu_custom_call.1} parent=1 // pred_fallthru
      _
    // Predicated region
    $region22: #{tpu_custom_call.1} parent=1 // pred_check
      _
    $region23: #{tpu_custom_call.1} parent=1 // pred_check_branch
      %28 = sbr.rel (0) target = $region25
    $region24: #{tpu_custom_call.1} parent=1 // pred_region
      _
    $region25: #{tpu_custom_call.1} parent=1 // pred_fallthru
      _
    // Predicated region
    $region26: #{tpu_custom_call.1} parent=1 // pred_check
      _
    $region27: #{tpu_custom_call.1} parent=1 // pred_check_branch
      %30 = sbr.rel (0) target = $region29
    $region28: #{tpu_custom_call.1} parent=1 // pred_region
      _
    $region29: #{tpu_custom_call.1} parent=1 // pred_fallthru
      _
    // Predicated region
    $region30: #{tpu_custom_call.1} parent=1 // pred_check
      _
    $region31: #{tpu_custom_call.1} parent=1 // pred_check_branch
      %32 = sbr.rel (0) target = $region33
    $region32: #{tpu_custom_call.1} parent=1 // pred_region
      _
    $region33: #{tpu_custom_call.1} parent=1 // pred_fallthru
      _
    // Predicated region
    $region34: #{tpu_custom_call.1} parent=1 // pred_check
      _
    $region35: #{tpu_custom_call.1} parent=1 // pred_check_branch
      %34 = sbr.rel (0) target = $region37
    $region36: #{tpu_custom_call.1} parent=1 // pred_region
      _
    $region37: #{tpu_custom_call.1} parent=1 // pred_fallthru
      _
    %v36 = vlaneseq
    %v37 = vand.u32 %v36, 127
    %v38 = vand.u32 %v37, 15
    %v39 = vld [vmem:[%s0] sm:$0xff]
    %v40 = vld [vmem:[%s0 + $0x8] sm:$0xff]
    %v41 = vmul.f32 %v39, 0.999995
    %v42 = vmul.f32 %v40, 0.999995
    %v43 = vadd.f32 %v41, 0.0
    %v44 = vadd.f32 %v42, 0.0
    %45 = vrot.lane.b32.xlu0 %v43, 1
    %v46 = vpop.permute.xlu0 %45
    %47 = vrot.lane.b32.xlu0 %v44, 1
    %v48 = vpop.permute.xlu0 %47
    %vm49 = vcmp.ge.s32.totalorder %v38, 1
    %v50 = vsel %vm49, 1, 0
    %vm51 = vcmp.eq.s32.totalorder %v50, 1
    %v52 = vsel %vm51, %v46, 0.0
    %v53 = vsel %vm51, %v48, 0.0
    %54 = vrot.lane.b32.xlu0 %v43, 127
    %v55 = vpop.permute.xlu0 %54
    %56 = vrot.lane.b32.xlu0 %v44, 127
    %v57 = vpop.permute.xlu0 %56
    %vm58 = vcmp.lt.s32.totalorder %v38, 15
    %v59 = vsel %vm58, 1, 0
    %vm60 = vcmp.eq.s32.totalorder %v59, 1
    %v61 = vsel %vm60, %v55, 0.0
    %v62 = vsel %vm60, %v57, 0.0
    %v63 = vld [vmem:[%s1] sm:$0xf]
    %v64 = vld [vmem:[%s1 + $0x4] sm:$0xf]
    %v65 = vld [vmem:[%s1 + $0x8] sm:$0xf]
    %v66 = vld [vmem:[%s1 + $0xc] sm:$0xf]
    %v67 = vpack.c.bf16 %v53, %v52
    %v68 = vpack.c.bf16 %v44, %v43
    %v69 = vpack.c.bf16 %v62, %v61
    %v70 = vld [vmem:[%s4] sm:$0xff]
    %v71 = vld [vmem:[%s4 + $0x8] sm:$0xff]
    %v72 = vld [vmem:[%s4 + $0x10] sm:$0xff]
    %v73 = vld [vmem:[%s4 + $0x18] sm:$0xff]
    %75 = vset.pattern.permute.xlu0 0
    %76 = vperm.xlu0 %75, %v70
    %v77 = vpop.permute.xlu0 %76
    %80 = vset.pattern.permute.xlu0 0
    %81 = vperm.xlu0 %80, %v71
    %v82 = vpop.permute.xlu0 %81
    %85 = vset.pattern.permute.xlu0 0
    %86 = vperm.xlu0 %85, %v72
    %v87 = vpop.permute.xlu0 %86
    %90 = vset.pattern.permute.xlu0 0
    %91 = vperm.xlu0 %90, %v73
    %v92 = vpop.permute.xlu0 %91
    %v98 = vunpack.c.l.b16 %v63
    %v99 = vunpack.c.l.b16 %v64
    %v100 = vunpack.c.l.b16 %v65
    %v101 = vunpack.c.l.b16 %v66
    %v102 = vpack.c.b16 %v99, %v98
    %v103 = vpack.c.b16 %v101, %v100
    %vm104 = vcmask 392192
    %v106 = vsel %vm104, %v102, 0
    %v109 = vsel %vm104, %v103, 0
    %111 = vmatprep.subr.bf16.mxu0 0
    %112 = vmatpush1.bf16.msra.mxu0 0
    %113 = vmatprep.subr.bf16.mxu0 0
    %114 = vmatpush1.bf16.msra.mxu0 0
    %115 = vmatprep.subr.bf16.mxu0 0
    %116 = vmatpush1.bf16.msra.mxu0 0
    %117 = vmatprep.subr.bf16.mxu0 0
    %118 = vmatpush1.bf16.msra.mxu0 0
    %119 = vmatprep.subr.bf16.mxu0 0
    %120 = vmatpush1.bf16.msra.mxu0 0
    %121 = vmatprep.subr.bf16.mxu0 0
    %122 = vmatpush1.bf16.msra.mxu0 %v69
    %123 = vmatprep.subr.bf16.mxu0 0
    %124 = vmatpush1.bf16.msra.mxu0 %v68
    %125 = vmatprep.subr.bf16.mxu0 0
    %126 = vmatpush1.bf16.msra.mxu0 %v67
    %127 = vmatprep.subr.bf16.mxu0 0
    %128 = vmatpush2.bf16.msra.mxu0 0
    %129 = vmatprep.subr.bf16.mxu0 0
    %130 = vmatpush2.bf16.msra.mxu0 0
    %131 = vmatprep.subr.bf16.mxu0 0
    %132 = vmatpush2.bf16.msra.mxu0 0
    %133 = vmatprep.subr.bf16.mxu0 0
    %134 = vmatpush2.bf16.msra.mxu0 0
    %135 = vmatprep.subr.bf16.mxu0 0
    %136 = vmatpush2.bf16.msra.mxu0 0
    %137 = vmatprep.subr.bf16.mxu0 0
    %138 = vmatpush2.bf16.msra.mxu0 0
    %139 = vmatprep.subr.bf16.mxu0 0
    %140 = vmatpush2.bf16.msra.mxu0 0
    %141 = vmatprep.subr.bf16.mxu0 0
    %142 = vmatpush2.bf16.msra.mxu0 0
    %143 = vmatprep.mubr.bf16.mxu0 0
    %144 = vmatmul.mubr.bf16.gmra.mxu0 %v106
    %v145 = vpop.f32.mrf.mxu0
    %v146 = vadd.f32 %v77, %v145
    %v147 = vpop.f32.mrf.mxu0
    %v148 = vpop.f32.mrf.mxu0
    %v149 = vadd.f32 %v82, %v148
    %v150 = vpop.f32.mrf.mxu0
    %151 = vmatprep.mubr.bf16.mxu0 0
    %152 = vmatmul.mubr.bf16.gmra.mxu0 %v109
    %v153 = vpop.f32.mrf.mxu0
    %v154 = vadd.f32 %v87, %v153
    %v155 = vpop.f32.mrf.mxu0
    %v156 = vpop.f32.mrf.mxu0
    %v157 = vadd.f32 %v92, %v156
    %v158 = vpop.f32.mrf.mxu0
    %159 = vdwg.mxu0
    %v160 = vmax.f32 %v146, 0.0
    %v161 = vmax.f32 %v149, 0.0
    %v162 = vmax.f32 %v154, 0.0
    %v163 = vmax.f32 %v157, 0.0
    %164 = vrot.lane.b32.xlu0 %v160, 6
    %v165 = vpop.permute.xlu0 %164
    %166 = vrot.lane.b32.xlu0 %v161, 6
    %v167 = vpop.permute.xlu0 %166
    %168 = vrot.lane.b32.xlu0 %v162, 6
    %v169 = vpop.permute.xlu0 %168
    %170 = vrot.lane.b32.xlu0 %v163, 6
    %v171 = vpop.permute.xlu0 %170
    %vm172 = vcmp.ge.s32.totalorder %v38, 6
    %v173 = vsel %vm172, 1, 0
    %vm174 = vcmp.eq.s32.totalorder %v173, 1
    %v175 = vsel %vm174, %v165, 0.0
    %v176 = vsel %vm174, %v167, 0.0
    %v177 = vsel %vm174, %v169, 0.0
    %v178 = vsel %vm174, %v171, 0.0
    %179 = vrot.lane.b32.xlu0 %v160, 4
    %v180 = vpop.permute.xlu0 %179
    %181 = vrot.lane.b32.xlu0 %v161, 4
    %v182 = vpop.permute.xlu0 %181
    %183 = vrot.lane.b32.xlu0 %v162, 4
    %v184 = vpop.permute.xlu0 %183
    %185 = vrot.lane.b32.xlu0 %v163, 4
    %v186 = vpop.permute.xlu0 %185
    %vm187 = vcmp.ge.s32.totalorder %v38, 4
    %v188 = vsel %vm187, 1, 0
    %vm189 = vcmp.eq.s32.totalorder %v188, 1
    %v190 = vsel %vm189, %v180, 0.0
    %v191 = vsel %vm189, %v182, 0.0
    %v192 = vsel %vm189, %v184, 0.0
    %v193 = vsel %vm189, %v186, 0.0
    %194 = vrot.lane.b32.xlu0 %v160, 2
    %v195 = vpop.permute.xlu0 %194
    %196 = vrot.lane.b32.xlu0 %v161, 2
    %v197 = vpop.permute.xlu0 %196
    %198 = vrot.lane.b32.xlu0 %v162, 2
    %v199 = vpop.permute.xlu0 %198
    %200 = vrot.lane.b32.xlu0 %v163, 2
    %v201 = vpop.permute.xlu0 %200
    %vm202 = vcmp.ge.s32.totalorder %v38, 2
    %v203 = vsel %vm202, 1, 0
    %vm204 = vcmp.eq.s32.totalorder %v203, 1
    %v205 = vsel %vm204, %v195, 0.0
    %v206 = vsel %vm204, %v197, 0.0
    %v207 = vsel %vm204, %v199, 0.0
    %v208 = vsel %vm204, %v201, 0.0
    %209 = vrot.lane.b32.xlu0 %v160, 126
    %v210 = vpop.permute.xlu0 %209
    %211 = vrot.lane.b32.xlu0 %v161, 126
    %v212 = vpop.permute.xlu0 %211
    %213 = vrot.lane.b32.xlu0 %v162, 126
    %v214 = vpop.permute.xlu0 %213
    %215 = vrot.lane.b32.xlu0 %v163, 126
    %v216 = vpop.permute.xlu0 %215
    %vm217 = vcmp.lt.s32.totalorder %v38, 14
    %v218 = vsel %vm217, 1, 0
    %vm219 = vcmp.eq.s32.totalorder %v218, 1
    %v220 = vsel %vm219, %v210, 0.0
    %v221 = vsel %vm219, %v212, 0.0
    %v222 = vsel %vm219, %v214, 0.0
    %v223 = vsel %vm219, %v216, 0.0
    %224 = vrot.lane.b32.xlu0 %v160, 124
    %v225 = vpop.permute.xlu0 %224
    %226 = vrot.lane.b32.xlu0 %v161, 124
    %v227 = vpop.permute.xlu0 %226
    %228 = vrot.lane.b32.xlu0 %v162, 124
    %v229 = vpop.permute.xlu0 %228
    %230 = vrot.lane.b32.xlu0 %v163, 124
    %v231 = vpop.permute.xlu0 %230
    %vm232 = vcmp.lt.s32.totalorder %v38, 12
    %v233 = vsel %vm232, 1, 0
    %vm234 = vcmp.eq.s32.totalorder %v233, 1
    %v235 = vsel %vm234, %v225, 0.0
    %v236 = vsel %vm234, %v227, 0.0
    %v237 = vsel %vm234, %v229, 0.0
    %v238 = vsel %vm234, %v231, 0.0
    %239 = vrot.lane.b32.xlu0 %v160, 122
    %v240 = vpop.permute.xlu0 %239
    %241 = vrot.lane.b32.xlu0 %v161, 122
    %v242 = vpop.permute.xlu0 %241
    %243 = vrot.lane.b32.xlu0 %v162, 122
    %v244 = vpop.permute.xlu0 %243
    %245 = vrot.lane.b32.xlu0 %v163, 122
    %v246 = vpop.permute.xlu0 %245
    %vm247 = vcmp.lt.s32.totalorder %v38, 10
    %v248 = vsel %vm247, 1, 0
    %vm249 = vcmp.eq.s32.totalorder %v248, 1
    %v250 = vsel %vm249, %v240, 0.0
    %v251 = vsel %vm249, %v242, 0.0
    %v252 = vsel %vm249, %v244, 0.0
    %v253 = vsel %vm249, %v246, 0.0
    %v254 = vld [vmem:[%s2] sm:$0xff]
    %v255 = vld [vmem:[%s2 + $0x8] sm:$0xff]
    %v256 = vld [vmem:[%s2 + $0x10] sm:$0xff]
    %v257 = vld [vmem:[%s2 + $0x18] sm:$0xff]
    %v258 = vpack.c.bf16 %v176, %v175
    %v259 = vpack.c.bf16 %v178, %v177
    %v260 = vpack.c.bf16 %v191, %v190
    %v261 = vpack.c.bf16 %v193, %v192
    %v262 = vpack.c.bf16 %v206, %v205
    %v263 = vpack.c.bf16 %v208, %v207
    %v264 = vpack.c.bf16 %v161, %v160
    %v265 = vpack.c.bf16 %v163, %v162
    %v266 = vpack.c.bf16 %v221, %v220
    %v267 = vpack.c.bf16 %v223, %v222
    %v268 = vpack.c.bf16 %v236, %v235
    %v269 = vpack.c.bf16 %v238, %v237
    %v270 = vpack.c.bf16 %v251, %v250
    %v271 = vpack.c.bf16 %v253, %v252
    %v272 = vld [vmem:[%s5] sm:$0xff]
    %v273 = vld [vmem:[%s5 + $0x8] sm:$0xff]
    %v274 = vld [vmem:[%s5 + $0x10] sm:$0xff]
    %v275 = vld [vmem:[%s5 + $0x18] sm:$0xff]
    %277 = vset.pattern.permute.xlu0 0
    %278 = vperm.xlu0 %277, %v272
    %v279 = vpop.permute.xlu0 %278
    %282 = vset.pattern.permute.xlu0 0
    %283 = vperm.xlu0 %282, %v273
    %v284 = vpop.permute.xlu0 %283
    %287 = vset.pattern.permute.xlu0 0
    %288 = vperm.xlu0 %287, %v274
    %v289 = vpop.permute.xlu0 %288
    %292 = vset.pattern.permute.xlu0 0
    %293 = vperm.xlu0 %292, %v275
    %v294 = vpop.permute.xlu0 %293
    %v300 = vunpack.c.l.b16 %v254
    %v301 = vunpack.c.h.b16 %v254
    %v302 = vunpack.c.l.b16 %v255
    %v303 = vunpack.c.h.b16 %v255
    %v304 = vunpack.c.l.b16 %v256
    %v305 = vunpack.c.h.b16 %v256
    %v306 = vunpack.c.l.b16 %v257
    %v307 = vunpack.c.h.b16 %v257
    %v308 = vpack.c.b16 %v302, %v300
    %v309 = vpack.c.b16 %v303, %v301
    %v310 = vpack.c.b16 %v306, %v304
    %v311 = vpack.c.b16 %v307, %v305
    %vm314 = vcmask 785408
    %v316 = vsel %vm314, %v309, 0
    %v319 = vsel %vm314, %v311, 0
    %321 = vmatprep.subr.bf16.mxu0 0
    %322 = vmatpush1.bf16.msra.mxu0 %v265
    %323 = vmatprep.subr.bf16.mxu0 0
    %324 = vmatpush1.bf16.msra.mxu0 %v264
    %325 = vmatprep.subr.bf16.mxu0 0
    %326 = vmatpush1.bf16.msra.mxu0 %v263
    %327 = vmatprep.subr.bf16.mxu0 0
    %328 = vmatpush1.bf16.msra.mxu0 %v262
    %329 = vmatprep.subr.bf16.mxu0 0
    %330 = vmatpush1.bf16.msra.mxu0 %v261
    %331 = vmatprep.subr.bf16.mxu0 0
    %332 = vmatpush1.bf16.msra.mxu0 %v260
    %333 = vmatprep.subr.bf16.mxu0 0
    %334 = vmatpush1.bf16.msra.mxu0 %v259
    %335 = vmatprep.subr.bf16.mxu0 0
    %336 = vmatpush1.bf16.msra.mxu0 %v258
    %337 = vmatprep.subr.bf16.mxu0 0
    %338 = vmatpush2.bf16.msra.mxu0 0
    %339 = vmatprep.subr.bf16.mxu0 0
    %340 = vmatpush2.bf16.msra.mxu0 0
    %341 = vmatprep.subr.bf16.mxu0 0
    %342 = vmatpush2.bf16.msra.mxu0 %v271
    %343 = vmatprep.subr.bf16.mxu0 0
    %344 = vmatpush2.bf16.msra.mxu0 %v270
    %345 = vmatprep.subr.bf16.mxu0 0
    %346 = vmatpush2.bf16.msra.mxu0 %v269
    %347 = vmatprep.subr.bf16.mxu0 0
    %348 = vmatpush2.bf16.msra.mxu0 %v268
    %349 = vmatprep.subr.bf16.mxu0 0
    %350 = vmatpush2.bf16.msra.mxu0 %v267
    %351 = vmatprep.subr.bf16.mxu0 0
    %352 = vmatpush2.bf16.msra.mxu0 %v266
    %353 = vmatprep.mubr.bf16.mxu0 %v316
    %354 = vmatmul.mubr.bf16.gmra.mxu0 %v308
    %v355 = vpop.f32.mrf.mxu0
    %v356 = vadd.f32 %v279, %v355
    %v357 = vpop.f32.mrf.mxu0
    %v358 = vpop.f32.mrf.mxu0
    %v359 = vadd.f32 %v284, %v358
    %v360 = vpop.f32.mrf.mxu0
    %361 = vmatprep.mubr.bf16.mxu0 %v319
    %362 = vmatmul.mubr.bf16.gmra.mxu0 %v310
    %v363 = vpop.f32.mrf.mxu0
    %v364 = vadd.f32 %v289, %v363
    %v365 = vpop.f32.mrf.mxu0
    %v366 = vpop.f32.mrf.mxu0
    %v367 = vadd.f32 %v294, %v366
    %v368 = vpop.f32.mrf.mxu0
    %369 = vdwg.mxu0
    %v370 = vmax.f32 %v356, 0.0
    %v371 = vmax.f32 %v359, 0.0
    %v372 = vmax.f32 %v364, 0.0
    %v373 = vmax.f32 %v367, 0.0
    %v374 = vadd.f32 %v370, %v160
    %v375 = vadd.f32 %v371, %v161
    %v376 = vadd.f32 %v372, %v162
    %v377 = vadd.f32 %v373, %v163
    %378 = vrot.lane.b32.xlu0 %v374, 2
    %v379 = vpop.permute.xlu0 %378
    %380 = vrot.lane.b32.xlu0 %v375, 2
    %v381 = vpop.permute.xlu0 %380
    %382 = vrot.lane.b32.xlu0 %v376, 2
    %v383 = vpop.permute.xlu0 %382
    %384 = vrot.lane.b32.xlu0 %v377, 2
    %v385 = vpop.permute.xlu0 %384
    %v386 = vsel %vm204, %v379, 0.0
    %v387 = vsel %vm204, %v381, 0.0
    %v388 = vsel %vm204, %v383, 0.0
    %v389 = vsel %vm204, %v385, 0.0
    %390 = vrot.lane.b32.xlu0 %v374, 126
    %v391 = vpop.permute.xlu0 %390
    %392 = vrot.lane.b32.xlu0 %v375, 126
    %v393 = vpop.permute.xlu0 %392
    %394 = vrot.lane.b32.xlu0 %v376, 126
    %v395 = vpop.permute.xlu0 %394
    %396 = vrot.lane.b32.xlu0 %v377, 126
    %v397 = vpop.permute.xlu0 %396
    %v398 = vsel %vm219, %v391, 0.0
    %v399 = vsel %vm219, %v393, 0.0
    %v400 = vsel %vm219, %v395, 0.0
    %v401 = vsel %vm219, %v397, 0.0
    %v402 = vld [vmem:[%s3] sm:$0xf]
    %v403 = vld [vmem:[%s3 + $0x4] sm:$0xf]
    %v404 = vld [vmem:[%s3 + $0x8] sm:$0xf]
    %v405 = vld [vmem:[%s3 + $0xc] sm:$0xf]
    %v406 = vpack.c.bf16 %v387, %v386
    %v407 = vpack.c.bf16 %v389, %v388
    %v408 = vpack.c.bf16 %v375, %v374
    %v409 = vpack.c.bf16 %v377, %v376
    %v410 = vpack.c.bf16 %v399, %v398
    %v411 = vpack.c.bf16 %v401, %v400
    %v412 = vld [vmem:[%s6] sm:$0xff]
    %v413 = vld [vmem:[%s6 + $0x8] sm:$0xff]
    %v414 = vld [vmem:[%s6 + $0x10] sm:$0xff]
    %v415 = vld [vmem:[%s6 + $0x18] sm:$0xff]
    %417 = vset.pattern.permute.xlu0 0
    %418 = vperm.xlu0 %417, %v412
    %v419 = vpop.permute.xlu0 %418
    %422 = vset.pattern.permute.xlu0 0
    %423 = vperm.xlu0 %422, %v413
    %v424 = vpop.permute.xlu0 %423
    %427 = vset.pattern.permute.xlu0 0
    %428 = vperm.xlu0 %427, %v414
    %v429 = vpop.permute.xlu0 %428
    %432 = vset.pattern.permute.xlu0 0
    %433 = vperm.xlu0 %432, %v415
    %v434 = vpop.permute.xlu0 %433
    %v440 = vunpack.c.l.b16 %v402
    %v441 = vunpack.c.l.b16 %v403
    %v442 = vunpack.c.l.b16 %v404
    %v443 = vunpack.c.l.b16 %v405
    %v444 = vpack.c.b16 %v441, %v440
    %v445 = vpack.c.b16 %v443, %v442
    %v447 = vsel %vm314, %v444, 0
    %v450 = vsel %vm314, %v445, 0
    %452 = vmatprep.subr.bf16.mxu0 0
    %453 = vmatpush1.bf16.msra.mxu0 0
    %454 = vmatprep.subr.bf16.mxu0 0
    %455 = vmatpush1.bf16.msra.mxu0 0
    %456 = vmatprep.subr.bf16.mxu0 0
    %457 = vmatpush1.bf16.msra.mxu0 %v411
    %458 = vmatprep.subr.bf16.mxu0 0
    %459 = vmatpush1.bf16.msra.mxu0 %v410
    %460 = vmatprep.subr.bf16.mxu0 0
    %461 = vmatpush1.bf16.msra.mxu0 %v409
    %462 = vmatprep.subr.bf16.mxu0 0
    %463 = vmatpush1.bf16.msra.mxu0 %v408
    %464 = vmatprep.subr.bf16.mxu0 0
    %465 = vmatpush1.bf16.msra.mxu0 %v407
    %466 = vmatprep.subr.bf16.mxu0 0
    %467 = vmatpush1.bf16.msra.mxu0 %v406
    %468 = vmatprep.subr.bf16.mxu0 0
    %469 = vmatpush2.bf16.msra.mxu0 0
    %470 = vmatprep.subr.bf16.mxu0 0
    %471 = vmatpush2.bf16.msra.mxu0 0
    %472 = vmatprep.subr.bf16.mxu0 0
    %473 = vmatpush2.bf16.msra.mxu0 0
    %474 = vmatprep.subr.bf16.mxu0 0
    %475 = vmatpush2.bf16.msra.mxu0 0
    %476 = vmatprep.subr.bf16.mxu0 0
    %477 = vmatpush2.bf16.msra.mxu0 0
    %478 = vmatprep.subr.bf16.mxu0 0
    %479 = vmatpush2.bf16.msra.mxu0 0
    %480 = vmatprep.subr.bf16.mxu0 0
    %481 = vmatpush2.bf16.msra.mxu0 0
    %482 = vmatprep.subr.bf16.mxu0 0
    %483 = vmatpush2.bf16.msra.mxu0 0
    %484 = vmatprep.mubr.bf16.mxu0 0
    %485 = vmatmul.mubr.bf16.gmra.mxu0 %v447
    %v486 = vpop.f32.mrf.mxu0
    %v487 = vadd.f32 %v419, %v486
    %v488 = vpop.f32.mrf.mxu0
    %v489 = vpop.f32.mrf.mxu0
    %v490 = vadd.f32 %v424, %v489
    %v491 = vpop.f32.mrf.mxu0
    %492 = vmatprep.mubr.bf16.mxu0 0
    %493 = vmatmul.mubr.bf16.gmra.mxu0 %v450
    %v494 = vpop.f32.mrf.mxu0
    %v495 = vadd.f32 %v429, %v494
    %v496 = vpop.f32.mrf.mxu0
    %v497 = vpop.f32.mrf.mxu0
    %v498 = vadd.f32 %v434, %v497
    %v499 = vpop.f32.mrf.mxu0
    %500 = vdwg.mxu0
    %v501 = vmax.f32 %v487, 0.0
    %v502 = vmax.f32 %v490, 0.0
    %v503 = vmax.f32 %v495, 0.0
    %v504 = vmax.f32 %v498, 0.0
    %v505 = vadd.f32 %v501, %v374
    %v506 = vadd.f32 %v502, %v375
    %v507 = vadd.f32 %v503, %v376
    %v508 = vadd.f32 %v504, %v377
    %509 = vrot.lane.b32.xlu0 %v505, 127
    %v510 = vpop.permute.xlu0 %509
    %511 = vrot.lane.b32.xlu0 %v506, 127
    %v512 = vpop.permute.xlu0 %511
    %513 = vrot.lane.b32.xlu0 %v507, 127
    %v514 = vpop.permute.xlu0 %513
    %515 = vrot.lane.b32.xlu0 %v508, 127
    %v516 = vpop.permute.xlu0 %515
    %v517 = vmax.f32 %v505, %v510
    %v518 = vmax.f32 %v506, %v512
    %v519 = vmax.f32 %v507, %v514
    %v520 = vmax.f32 %v508, %v516
    %v521 = vsel %vm60, %v517, %v505
    %v522 = vsel %vm60, %v518, %v506
    %v523 = vsel %vm60, %v519, %v507
    %v524 = vsel %vm60, %v520, %v508
    %525 = vrot.lane.b32.xlu0 %v521, 126
    %v526 = vpop.permute.xlu0 %525
    %527 = vrot.lane.b32.xlu0 %v522, 126
    %v528 = vpop.permute.xlu0 %527
    %529 = vrot.lane.b32.xlu0 %v523, 126
    %v530 = vpop.permute.xlu0 %529
    %531 = vrot.lane.b32.xlu0 %v524, 126
    %v532 = vpop.permute.xlu0 %531
    %v533 = vmax.f32 %v521, %v526
    %v534 = vmax.f32 %v522, %v528
    %v535 = vmax.f32 %v523, %v530
    %v536 = vmax.f32 %v524, %v532
    %v537 = vsel %vm219, %v533, %v521
    %v538 = vsel %vm219, %v534, %v522
    %v539 = vsel %vm219, %v535, %v523
    %v540 = vsel %vm219, %v536, %v524
    %541 = vrot.lane.b32.xlu0 %v537, 124
    %v542 = vpop.permute.xlu0 %541
    %543 = vrot.lane.b32.xlu0 %v538, 124
    %v544 = vpop.permute.xlu0 %543
    %545 = vrot.lane.b32.xlu0 %v539, 124
    %v546 = vpop.permute.xlu0 %545
    %547 = vrot.lane.b32.xlu0 %v540, 124
    %v548 = vpop.permute.xlu0 %547
    %v549 = vmax.f32 %v537, %v542
    %v550 = vmax.f32 %v538, %v544
    %v551 = vmax.f32 %v539, %v546
    %v552 = vmax.f32 %v540, %v548
    %v553 = vsel %vm234, %v549, %v537
    %v554 = vsel %vm234, %v550, %v538
    %v555 = vsel %vm234, %v551, %v539
    %v556 = vsel %vm234, %v552, %v540
    %557 = vrot.lane.b32.xlu0 %v553, 120
    %v558 = vpop.permute.xlu0 %557
    %559 = vrot.lane.b32.xlu0 %v554, 120
    %v560 = vpop.permute.xlu0 %559
    %561 = vrot.lane.b32.xlu0 %v555, 120
    %v562 = vpop.permute.xlu0 %561
    %563 = vrot.lane.b32.xlu0 %v556, 120
    %v564 = vpop.permute.xlu0 %563
    %vm565 = vcmp.lt.s32.totalorder %v38, 8
    %v566 = vmax.f32 %v553, %v558
    %v567 = vmax.f32 %v554, %v560
    %v568 = vmax.f32 %v555, %v562
    %v569 = vmax.f32 %v556, %v564
    %v570 = vsel %vm565, 1, 0
    %vm571 = vcmp.eq.s32.totalorder %v570, 1
    %v572 = vsel %vm571, %v566, %v553
    %v573 = vsel %vm571, %v567, %v554
    %v574 = vsel %vm571, %v568, %v555
    %v575 = vsel %vm571, %v569, %v556
    %v576 = vld [vmem:[%s7] sm:$0x1]
    %v577 = vld [vmem:[#allocation2] sm:$0x1]
    %579 = vset.pattern.permute.xlu0 0
    %580 = vperm.xlu0 %579, %v577
    %v581 = vpop.permute.xlu0 %580
    %v583 = vlaneseq
    %v584 = vshrl.u32 %v583, 7
    %v585 = vsub.s32 0, %v584
    %v586 = vrot.slane %v581, %v585
    %vm587 = vcmask 261120
    %v589 = vsel %vm587, %v576, 0
    %591 = vmatprep.subr.mxu0 0.0
    %592 = vmatpush1.msra.mxu0 0.0
    %593 = vmatprep.subr.mxu0 0.0
    %594 = vmatpush1.msra.mxu0 0.0
    %595 = vmatprep.subr.mxu0 0.0
    %596 = vmatpush1.msra.mxu0 0.0
    %597 = vmatprep.subr.mxu0 0.0
    %598 = vmatpush1.msra.mxu0 0.0
    %599 = vmatprep.subr.mxu0 0.0
    %600 = vmatpush1.msra.mxu0 0.0
    %601 = vmatprep.subr.mxu0 0.0
    %602 = vmatpush1.msra.mxu0 0.0
    %603 = vmatprep.subr.mxu0 0.0
    %604 = vmatpush1.msra.mxu0 0.0
    %605 = vmatprep.subr.mxu0 0.0
    %606 = vmatpush1.msra.mxu0 0.0
    %607 = vmatprep.subr.mxu0 0.0
    %608 = vmatpush1.msra.mxu0 0.0
    %609 = vmatprep.subr.mxu0 0.0
    %610 = vmatpush1.msra.mxu0 0.0
    %611 = vmatprep.subr.mxu0 0.0
    %612 = vmatpush1.msra.mxu0 0.0
    %613 = vmatprep.subr.mxu0 0.0
    %614 = vmatpush1.msra.mxu0 0.0
    %615 = vmatprep.subr.mxu0 0.0
    %616 = vmatpush1.msra.mxu0 %v575
    %617 = vmatprep.subr.mxu0 0.0
    %618 = vmatpush1.msra.mxu0 %v574
    %619 = vmatprep.subr.mxu0 0.0
    %620 = vmatpush1.msra.mxu0 %v573
    %621 = vmatprep.subr.mxu0 0.0
    %622 = vmatpush1.msra.mxu0 %v572
    %623 = vmatprep.subr.mxu0 0.0
    %624 = vmatpush2.msra.mxu0 0.0
    %625 = vmatprep.subr.mxu0 0.0
    %626 = vmatpush2.msra.mxu0 0.0
    %627 = vmatprep.subr.mxu0 0.0
    %628 = vmatpush2.msra.mxu0 0.0
    %629 = vmatprep.subr.mxu0 0.0
    %630 = vmatpush2.msra.mxu0 0.0
    %631 = vmatprep.subr.mxu0 0.0
    %632 = vmatpush2.msra.mxu0 0.0
    %633 = vmatprep.subr.mxu0 0.0
    %634 = vmatpush2.msra.mxu0 0.0
    %635 = vmatprep.subr.mxu0 0.0
    %636 = vmatpush2.msra.mxu0 0.0
    %637 = vmatprep.subr.mxu0 0.0
    %638 = vmatpush2.msra.mxu0 0.0
    %639 = vmatprep.subr.mxu0 0.0
    %640 = vmatpush2.msra.mxu0 0.0
    %641 = vmatprep.subr.mxu0 0.0
    %642 = vmatpush2.msra.mxu0 0.0
    %643 = vmatprep.subr.mxu0 0.0
    %644 = vmatpush2.msra.mxu0 0.0
    %645 = vmatprep.subr.mxu0 0.0
    %646 = vmatpush2.msra.mxu0 0.0
    %647 = vmatprep.subr.mxu0 0.0
    %648 = vmatpush2.msra.mxu0 0.0
    %649 = vmatprep.subr.mxu0 0.0
    %650 = vmatpush2.msra.mxu0 0.0
    %651 = vmatprep.subr.mxu0 0.0
    %652 = vmatpush2.msra.mxu0 0.0
    %653 = vmatprep.subr.mxu0 0.0
    %654 = vmatpush2.msra.mxu0 0.0
    %655 = vmatprep.mubr.f32.mxu0 0.0
    %656 = vmatmul.mubr.f32.gmra.mxu0 %v589
    %v657 = vpop.f32.mrf.mxu0
    %v658 = vadd.f32 %v586, %v657
    %v659 = vpop.f32.mrf.mxu0
    %660 = vdwg.mxu0
    %v661 = vsub.f32 0.0, %v658
    %v662 = vmul.f32 %v661, 1.442695
    %v663 = vpow.pop %v662
    %v664 = vadd.f32 %v663, 1.0
    %v665 = vrcp.pop %v664
    %666 = vst [vmem:[#allocation3] sm:$0x1] %v665
    // Predicated region
    $region38: #{tpu_custom_call.1} parent=1 // pred_check
      _
    $region39: #{tpu_custom_call.1} parent=1 // pred_check_branch
      %668 = sbr.rel (0) target = $region41
    $region40: #{tpu_custom_call.1} parent=1 // pred_region
      %s670 = ssub.s32 16, 16
      %671 = vsyncadd [#allocation4], %s670
      %s673 = sshll.u32 [#allocation3], 4
      %s674 = int_to_ptr.vmem [resolvable:$true] %s673
      %676 = dma.vmem_to_hbm [thread:$0]  %s674, 16, %s9, [#allocation4]
    $region41: #{tpu_custom_call.1} parent=1 // pred_fallthru
      _
    // Predicated region
    $region42: #{tpu_custom_call.1} parent=1 // pred_check
      _
    $region43: #{tpu_custom_call.1} parent=1 // pred_check_branch
      %678 = sbr.rel (0) target = $region45
    $region44: #{tpu_custom_call.1} parent=1 // pred_region
      %679 = dma.done [#allocation4], 16
    $region45: #{tpu_custom_call.1} parent=1 // pred_fallthru
      _
    %680 = vsyncpa [#allocation4], 1

</llo_original>
